<compile_context>
chip_gen: v7x
topology: tpu7x:2x2x1
jax: 0.10.0
libtpu: 0.0.40
codegen_flags: <defaults>
</compile_context>

<pallas_src>
from functools import partial

import numpy as np
import jax
import jax.numpy as jnp
from jax.experimental import pallas as pl
from jax.experimental.pallas import tpu as pltpu


def _round_up(x, m):
    return ((x + m - 1) // m) * m


def gcn_kernel(xa_ref, adj_ref, gw_ref, gb_ref, sel_ref, o_ref, *, n_pad, p):
    """Single-step HierarchyGCN forward.

    xa_ref : (n_pad + D, P) f32   [x with batch folded into lanes ; 0/1 bias-tiling block]
    adj_ref: (2*n_pad, n_pad + D) bf16   [[in_adj | edge_bias], [out_adj | out_edge_bias]]
    gw_ref : (P, G) bf16          narrow gate weights, one column per (gate, batch)
    gb_ref : (n_pad, G) f32       narrow gate biases
    sel_ref: (G, 3P) bf16         0/1 gate -> lane broadcast matrix
    o_ref  : (n_pad, P) f32
    """
    xa = xa_ref[...]                                    # (n_pad + D, P) f32
    x = xa[:n_pad]                                      # f32 -- element-wise path stays f32
    xa_bf = xa.astype(jnp.bfloat16)
    x_bf = x.astype(jnp.bfloat16)

    # Messages with edge biases folded into the contraction (depth n_pad + D):
    #   [in_msg; out_msg] = [[in_adj | eb], [out_adj | oeb]] @ [x ; T]
    m = jnp.dot(adj_ref[...], xa_bf, preferred_element_type=jnp.float32)   # (2*n_pad, P)
    in_msg, out_msg = m[:n_pad], m[n_pad:]

    # Narrow gate logits: one column per (gate, batch); only 3*B of the G lanes are meaningful.
    logits = jnp.dot(x_bf, gw_ref[...], preferred_element_type=jnp.float32) + gb_ref[...]
    g = jax.nn.sigmoid(logits)                          # (n_pad, G)

    # Broadcast each scalar gate across its batch's D feature lanes via a 0/1 MXU matmul
    # (keeps everything on the MXU; no XLU cross-lane traffic).
    gates = jnp.dot(g.astype(jnp.bfloat16), sel_ref[...],
                    preferred_element_type=jnp.float32)  # (n_pad, 3P)
    g_in, g_out, g_loop = gates[:, :p], gates[:, p:2 * p], gates[:, 2 * p:]

    msg = in_msg * g_in + out_msg * g_out + x * g_loop
    # TODO(synk): dropout (config.structure_encoder.node.dropout) omitted -- eval-mode identity.
    o_ref[...] = jnp.maximum(msg, 0.0).astype(o_ref.dtype)


def pack_params(params, batch_size):
    """Precompute fused, lane-padded constant operands (done once per model / batch size)."""
    N, D = params["edge_bias"].shape
    B = batch_size
    Np = _round_up(N, 8)              # keep node slices on (8, 128) vreg tile boundaries
    BD = B * D
    P = _round_up(BD, 128)            # batch folded into the lane axis
    G = _round_up(3 * B, 128)         # one narrow-gate column per (gate, batch)

    def pad2(a, rows, cols):
        a = np.asarray(a, np.float32)
        return np.pad(a, ((0, rows - a.shape[0]), (0, cols - a.shape[1])))

    in_adj = pad2(params["in_adj"], Np, Np)
    out_adj = pad2(params["out_adj"], Np, Np)
    eb = pad2(params["edge_bias"], Np, D)
    oeb = pad2(params["out_edge_bias"], Np, D)

    # Augmented adjacency: edge biases become extra contraction columns (depth N -> Np + D).
    adj_aug = np.concatenate(
        [np.concatenate([in_adj, eb], axis=1),
         np.concatenate([out_adj, oeb], axis=1)], axis=0)                # (2Np, Np + D)

    # 0/1 bias-tiling block appended to x in the wrapper: T[d, b*D + d] = 1.
    t = np.zeros((D, P), np.float32)
    for b in range(B):
        t[np.arange(D), b * D + np.arange(D)] = 1.0

    # Narrow gate weights: column (gate*B + b) holds that gate's (D,) weight in rows b*D..b*D+D.
    gate_vecs = [np.asarray(params["gate_weight"], np.float32).reshape(D),
                 np.asarray(params["out_gate_weight"], np.float32).reshape(D),
                 np.asarray(params["loop_gate"], np.float32).reshape(D)]
    gw = np.zeros((P, G), np.float32)
    for gi, w in enumerate(gate_vecs):
        for b in range(B):
            gw[b * D:(b + 1) * D, gi * B + b] = w

    # Narrow gate biases: per-node bias broadcast over that gate's B columns (loop gate: none).
    gb = np.zeros((Np, G), np.float32)
    gb[:N, 0 * B:1 * B] = np.asarray(params["bias_gate"], np.float32)
    gb[:N, 1 * B:2 * B] = np.asarray(params["out_bias_gate"], np.float32)

    # 0/1 selection matrix: broadcast gate (gate, b) across output lanes gate*P + b*D .. + D.
    sel = np.zeros((G, 3 * P), np.float32)
    for gi in range(3):
        for b in range(B):
            sel[gi * B + b, gi * P + b * D: gi * P + (b + 1) * D] = 1.0

    return {
        "adj_aug": jnp.asarray(adj_aug, jnp.bfloat16),
        "t": jnp.asarray(t, jnp.float32),
        "gate_w": jnp.asarray(gw, jnp.bfloat16),
        "gate_b": jnp.asarray(gb, jnp.float32),
        "sel": jnp.asarray(sel, jnp.bfloat16),
        "dims": (N, Np, D, B, P, G),
    }


def hierarchy_gcn_forward(x, packed):
    """x: (B, N, D) float32 node features. Returns (B, N, D) float32."""
    N, Np, D, B, P, G = packed["dims"]
    assert x.shape == (B, N, D)
    BD = B * D

    # Fold batch into the lane axis (lane = b*D + d), pad nodes/lanes, append bias-tiling block.
    x_fold = jnp.transpose(x, (1, 0, 2)).reshape(N, BD)
    x_fold = jnp.pad(x_fold, ((0, Np - N), (0, P - BD)))
    x_aug = jnp.concatenate([x_fold, packed["t"]], axis=0)              # (Np + D, P) f32

    full = lambda shape: pl.BlockSpec(shape, lambda i: (0, 0))
    out_pad = pl.pallas_call(
        partial(gcn_kernel, n_pad=Np, p=P),
        out_shape=jax.ShapeDtypeStruct((Np, P), jnp.float32),
        grid=(1,),   # whole batch in one step: no pipeline prologue/epilogue overhead
        in_specs=[
            full(x_aug.shape),               # activations + tiling block (f32; cast in kernel)
            full(packed["adj_aug"].shape),   # stacked [in|bias ; out|bias] adjacency (bf16)
            full(packed["gate_w"].shape),    # narrow gate weights (bf16)
            full(packed["gate_b"].shape),    # narrow gate biases (f32)
            full(packed["sel"].shape),       # 0/1 gate lane-broadcast matrix (bf16)
        ],
        out_specs=full((Np, P)),
        compiler_params=pltpu.CompilerParams(
            dimension_semantics=("arbitrary",),
            vmem_limit_bytes=32 * 1024 * 1024,
        ),
    )(x_aug, packed["adj_aug"], packed["gate_w"], packed["gate_b"], packed["sel"])

    # Undo the lane fold / padding outside the kernel (trivial XLA ops at this size).
    return out_pad[:N, :BD].reshape(N, B, D).transpose(1, 0, 2)


def reference_forward(x, p):
    """Pure-JAX reference mirroring the PyTorch HierarchyGCN forward (eval mode)."""
    in_msg = jnp.einsum("ij,bjd->bid", p["in_adj"], x) + p["edge_bias"]
    in_gate = jax.nn.sigmoid(jnp.einsum("bnd,do->bno", x, p["gate_weight"]) + p["bias_gate"])
    msg = in_msg * in_gate
    out_msg = jnp.einsum("ij,bjd->bid", p["out_adj"], x) + p["out_edge_bias"]
    out_gate = jax.nn.sigmoid(jnp.einsum("bnd,do->bno", x, p["out_gate_weight"]) + p["out_bias_gate"])
    msg = msg + out_msg * out_gate
    loop_gate = jax.nn.sigmoid(jnp.einsum("bnd,do->bno", x, p["loop_gate"]))
    msg = msg + x * loop_gate
    return jax.nn.relu(msg)


def build_hierarchy_adjacency(num_nodes):
    """Deterministic synthetic label hierarchy (binary tree): parent(i) = (i-1)//2.
    node_prob_from_child[p][c] = 1.0, node_prob_from_parent[c][p] = prior prob."""
    in_mat = np.zeros((num_nodes, num_nodes), dtype=np.float32)   # from child
    out_mat = np.zeros((num_nodes, num_nodes), dtype=np.float32)  # from parent
    for c in range(1, num_nodes):
        p = (c - 1) // 2
        in_mat[p, c] = 1.0
        out_mat[c, p] = 1.0 / (1.0 + (c % 3))  # deterministic pseudo-probability
    return jnp.asarray(in_mat), jnp.asarray(out_mat)


def init_params(key, num_nodes, in_dim):
    ks = jax.random.split(key, 7)
    xavier = lambda k, shape: (jax.random.uniform(k, shape, jnp.float32, -1.0, 1.0)
                               * np.sqrt(6.0 / sum(shape)))
    in_adj, out_adj = build_hierarchy_adjacency(num_nodes)
    return {
        "in_adj": in_adj,
        "out_adj": out_adj,
        "edge_bias": xavier(ks[0], (num_nodes, in_dim)),
        "gate_weight": xavier(ks[1], (in_dim, 1)),
        "bias_gate": xavier(ks[2], (num_nodes, 1)),
        "out_edge_bias": xavier(ks[3], (num_nodes, in_dim)),
        "out_gate_weight": xavier(ks[4], (in_dim, 1)),
        "out_bias_gate": xavier(ks[5], (num_nodes, 1)),
        "loop_gate": xavier(ks[6], (in_dim, 1)),
    }


if __name__ == "__main__":
    B, N, D = 2, 8, 32   # batch, num label nodes, structure-encoder node dimension
    key = jax.random.PRNGKey(0)
    k_x, k_p = jax.random.split(key)
    x = jax.random.normal(k_x, (B, N, D), dtype=jnp.float32)
    params = init_params(k_p, N, D)
    packed = pack_params(params, B)

    out = hierarchy_gcn_forward(x, packed)
    out = jax.block_until_ready(out)

    ref = reference_forward(x, params)
    # bf16 MXU operands with f32 accumulation: tolerance loosened vs the f32 reference
    # (per review ~1e-2 relative; adjacency 0/1 values and sigmoid gates are tolerant).
    np.testing.assert_allclose(np.asarray(out), np.asarray(ref), rtol=2e-2, atol=2e-2)

    print("KERNEL_OK")
</pallas_src>

<mosaic_0001>
module attributes {stable_mosaic.version = 11 : i64} {
  func.func @gcn_kernel(%arg0: i32, %arg1: memref<40x128xf32, #tpu.memory_space<vmem>>, %arg2: memref<16x40xbf16, #tpu.memory_space<vmem>>, %arg3: memref<128x128xbf16, #tpu.memory_space<vmem>>, %arg4: memref<8x128xf32, #tpu.memory_space<vmem>>, %arg5: memref<128x384xbf16, #tpu.memory_space<vmem>>, %arg6: memref<8x128xf32, #tpu.memory_space<vmem>>) attributes {dimension_semantics = [#tpu.dimension_semantics<arbitrary>], iteration_bounds = array<i64: 1>, scalar_prefetch = 0 : i64, scratch_operands = 0 : i64, tpu.core_type = #tpu.core_type<tc>, window_params = [{pipeline_mode = #tpu.pipeline_mode<synchronous>, transform_indices = @transform_0, window_bounds = array<i64: 40, 128>}, {pipeline_mode = #tpu.pipeline_mode<synchronous>, transform_indices = @transform_1, window_bounds = array<i64: 16, 40>}, {pipeline_mode = #tpu.pipeline_mode<synchronous>, transform_indices = @transform_2, window_bounds = array<i64: 128, 128>}, {pipeline_mode = #tpu.pipeline_mode<synchronous>, transform_indices = @transform_3, window_bounds = array<i64: 8, 128>}, {pipeline_mode = #tpu.pipeline_mode<synchronous>, transform_indices = @transform_4, window_bounds = array<i64: 128, 384>}, {pipeline_mode = #tpu.pipeline_mode<synchronous>, transform_indices = @transform_5, window_bounds = array<i64: 8, 128>}]} {
    %c0 = arith.constant 0 : index
    %c0_0 = arith.constant 0 : index
    %0 = vector.load %arg1[%c0, %c0_0] : memref<40x128xf32, #tpu.memory_space<vmem>>, vector<40x128xf32>
    %1 = vector.extract_strided_slice %0 {offsets = [0, 0], sizes = [8, 128], strides = [1, 1]} : vector<40x128xf32> to vector<8x128xf32>
    %2 = arith.truncf %0 : vector<40x128xf32> to vector<40x128xbf16>
    %3 = arith.truncf %1 : vector<8x128xf32> to vector<8x128xbf16>
    %c0_1 = arith.constant 0 : index
    %c0_2 = arith.constant 0 : index
    %4 = vector.load %arg2[%c0_1, %c0_2] : memref<16x40xbf16, #tpu.memory_space<vmem>>, vector<16x40xbf16>
    %cst = arith.constant dense<0.000000e+00> : vector<16x128xf32>
    %5 = tpu.matmul %4, %2, %cst {dimension_numbers = #tpu.dot_dimension_numbers<[1], [0], [0], [1], [0, 0, 1, 1], [], []>} : vector<16x40xbf16>, vector<40x128xbf16>, vector<16x128xf32> -> vector<16x128xf32>
    %6 = vector.extract_strided_slice %5 {offsets = [0, 0], sizes = [8, 128], strides = [1, 1]} : vector<16x128xf32> to vector<8x128xf32>
    %7 = vector.extract_strided_slice %5 {offsets = [8, 0], sizes = [8, 128], strides = [1, 1]} : vector<16x128xf32> to vector<8x128xf32>
    %c0_3 = arith.constant 0 : index
    %c0_4 = arith.constant 0 : index
    %8 = vector.load %arg3[%c0_3, %c0_4] : memref<128x128xbf16, #tpu.memory_space<vmem>>, vector<128x128xbf16>
    %cst_5 = arith.constant dense<0.000000e+00> : vector<8x128xf32>
    %9 = tpu.matmul %3, %8, %cst_5 {dimension_numbers = #tpu.dot_dimension_numbers<[1], [0], [0], [1], [0, 0, 1, 1], [], []>} : vector<8x128xbf16>, vector<128x128xbf16>, vector<8x128xf32> -> vector<8x128xf32>
    %c0_6 = arith.constant 0 : index
    %c0_7 = arith.constant 0 : index
    %10 = vector.load %arg4[%c0_6, %c0_7] : memref<8x128xf32, #tpu.memory_space<vmem>>, vector<8x128xf32>
    %11 = arith.addf %9, %10 : vector<8x128xf32>
    %12 = arith.negf %11 : vector<8x128xf32>
    %13 = math.exp %12 : vector<8x128xf32>
    %cst_8 = arith.constant 1.000000e+00 : f32
    %14 = vector.broadcast %cst_8 : f32 to vector<8x128xf32>
    %15 = arith.addf %14, %13 : vector<8x128xf32>
    %16 = arith.divf %14, %15 : vector<8x128xf32>
    %17 = arith.truncf %16 : vector<8x128xf32> to vector<8x128xbf16>
    %c0_9 = arith.constant 0 : index
    %c0_10 = arith.constant 0 : index
    %18 = vector.load %arg5[%c0_9, %c0_10] : memref<128x384xbf16, #tpu.memory_space<vmem>>, vector<128x384xbf16>
    %cst_11 = arith.constant dense<0.000000e+00> : vector<8x384xf32>
    %19 = tpu.matmul %17, %18, %cst_11 {dimension_numbers = #tpu.dot_dimension_numbers<[1], [0], [0], [1], [0, 0, 1, 1], [], []>} : vector<8x128xbf16>, vector<128x384xbf16>, vector<8x384xf32> -> vector<8x384xf32>
    %20 = vector.extract_strided_slice %19 {offsets = [0, 0], sizes = [8, 128], strides = [1, 1]} : vector<8x384xf32> to vector<8x128xf32>
    %21 = vector.extract_strided_slice %19 {offsets = [0, 128], sizes = [8, 128], strides = [1, 1]} : vector<8x384xf32> to vector<8x128xf32>
    %22 = vector.extract_strided_slice %19 {offsets = [0, 256], sizes = [8, 128], strides = [1, 1]} : vector<8x384xf32> to vector<8x128xf32>
    %23 = arith.mulf %6, %20 : vector<8x128xf32>
    %24 = arith.mulf %7, %21 : vector<8x128xf32>
    %25 = arith.addf %23, %24 : vector<8x128xf32>
    %26 = arith.mulf %1, %22 : vector<8x128xf32>
    %27 = arith.addf %25, %26 : vector<8x128xf32>
    %cst_12 = arith.constant 0.000000e+00 : f32
    %28 = vector.broadcast %cst_12 : f32 to vector<8x128xf32>
    %29 = arith.maximumf %27, %28 : vector<8x128xf32>
    %c0_13 = arith.constant 0 : index
    %c0_14 = arith.constant 0 : index
    %30 = vector.load %arg6[%c0_13, %c0_14] : memref<8x128xf32, #tpu.memory_space<vmem>>, vector<8x128xf32>
    tpu.vector_store %arg6[%c0_13, %c0_14], %29 {strides = array<i32>} : memref<8x128xf32, #tpu.memory_space<vmem>>, vector<8x128xf32>,
    return
  }
  func.func @transform_0(%arg0: i32) -> (i32, i32) {
    %c0_i32 = arith.constant 0 : i32
    %c0_i32_0 = arith.constant 0 : i32
    %c0_i32_1 = arith.constant 0 : i32
    return %c0_i32, %c0_i32_0 : i32, i32
  }
  func.func @transform_1(%arg0: i32) -> (i32, i32) {
    %c0_i32 = arith.constant 0 : i32
    %c0_i32_0 = arith.constant 0 : i32
    %c0_i32_1 = arith.constant 0 : i32
    return %c0_i32, %c0_i32_0 : i32, i32
  }
  func.func @transform_2(%arg0: i32) -> (i32, i32) {
    %c0_i32 = arith.constant 0 : i32
    %c0_i32_0 = arith.constant 0 : i32
    %c0_i32_1 = arith.constant 0 : i32
    return %c0_i32, %c0_i32_0 : i32, i32
  }
  func.func @transform_3(%arg0: i32) -> (i32, i32) {
    %c0_i32 = arith.constant 0 : i32
    %c0_i32_0 = arith.constant 0 : i32
    %c0_i32_1 = arith.constant 0 : i32
    return %c0_i32, %c0_i32_0 : i32, i32
  }
  func.func @transform_4(%arg0: i32) -> (i32, i32) {
    %c0_i32 = arith.constant 0 : i32
    %c0_i32_0 = arith.constant 0 : i32
    %c0_i32_1 = arith.constant 0 : i32
    return %c0_i32, %c0_i32_0 : i32, i32
  }
  func.func @transform_5(%arg0: i32) -> (i32, i32) {
    %c0_i32 = arith.constant 0 : i32
    %c0_i32_0 = arith.constant 0 : i32
    %c0_i32_1 = arith.constant 0 : i32
    return %c0_i32, %c0_i32_0 : i32, i32
  }
}

</mosaic_0001>

<llo_original>
// kernel: tpu_custom_call.1
$region0: #{tpu_custom_call.1}
  #allocation0 [shape = 'u32[]', space=smem, size = 0x4, offset = 0x4, fixed_abs, tag = 'smem constant byte address 0x4 - core index']
  #allocation1 [shape = 'u32[144,128]{1,0:T(1,128)}', space=vmem, size = 0x12000, scoped, tag = 'internal scratch']
  %s0 = inlined_call_operand.hbm [shape: f32[40,128], index: 0, kind: input, shape index: {}]
  %s1 = inlined_call_operand.hbm [shape: bf16[16,40], index: 1, kind: input, shape index: {}]
  %s2 = inlined_call_operand.hbm [shape: bf16[128,128], index: 2, kind: input, shape index: {}]
  %s3 = inlined_call_operand.vmem [shape: f32[8,128], index: 3, kind: input, shape index: {}]
  %s4 = inlined_call_operand.hbm [shape: bf16[128,384], index: 4, kind: input, shape index: {}]
  %s5 = inlined_call_operand.hbm [shape: f32[8,128], index: 5, kind: output, shape index: {}]
  %s6 = sld [smem:[#allocation0]]
  $region46: #{tpu_custom_call.1} parent=0
    _
  %s8 = ssub.s32 1, %s6
  %s9 = scalar_select 0, %s8, %s6
  $region1: #{tpu_custom_call.1} parent=0
    #allocation2 [shape = 'u8[20480]{0}', space=vmem, size = 0x5000, scoped, tag = 'input window, operand 0, single buffered']
    #allocation3 [shape = 's32[1]{0}', space=sflag, size = 0x4, scoped, tag = 'scoped memory for tpu_custom_call.1']
    #allocation4 [shape = 's32[1]{0}', space=sflag, size = 0x4, scoped, tag = 'scoped memory for tpu_custom_call.1']
    #allocation5 [shape = 'u8[4096]{0}', space=vmem, size = 0x1000, scoped, tag = 'input window, operand 1, single buffered']
    #allocation6 [shape = 's32[1]{0}', space=sflag, size = 0x4, scoped, tag = 'scoped memory for tpu_custom_call.1']
    #allocation7 [shape = 'u8[32768]{0}', space=vmem, size = 0x8000, scoped, tag = 'input window, operand 2, single buffered']
    #allocation8 [shape = 'u8[98304]{0}', space=vmem, size = 0x18000, scoped, tag = 'input window, operand 4, single buffered']
    #allocation9 [shape = 's32[1]{0}', space=sflag, size = 0x4, scoped, tag = 'scoped memory for tpu_custom_call.1']
    #allocation10 [shape = 'u8[4096]{0}', space=vmem, size = 0x1000, scoped, tag = 'output window, operand 0, single buffered']
    %10 = vsyncpa [#allocation3], 0
    %11 = vsyncpa [#allocation6], 0
    %12 = vsyncpa [#allocation9], 0
    %13 = vsyncpa [#allocation4], 0
    // Predicated region
    $region2: #{tpu_custom_call.1} parent=1 // pred_check
      _
    $region3: #{tpu_custom_call.1} parent=1 // pred_check_branch
      %15 = sbr.rel (0) target = $region5
    $region4: #{tpu_custom_call.1} parent=1 // pred_region
      %s17 = ssub.s32 640, 640
      %18 = vsyncadd [#allocation3], %s17
      %s19 = sshll.u32 [#allocation2], 4
      %s20 = int_to_ptr.vmem [resolvable:$true] %s19
      %25 = dma.hbm_to_vmem [thread:$0]  %s0, 640, %s20, [#allocation3], 128, 128, 8
    $region5: #{tpu_custom_call.1} parent=1 // pred_fallthru
      _
    // Predicated region
    $region6: #{tpu_custom_call.1} parent=1 // pred_check
      _
    $region7: #{tpu_custom_call.1} parent=1 // pred_check_branch
      %27 = sbr.rel (0) target = $region9
    $region8: #{tpu_custom_call.1} parent=1 // pred_region
      %s29 = ssub.s32 128, 128
      %30 = vsyncadd [#allocation6], %s29
      %s31 = sshll.u32 [#allocation5], 4
      %s32 = int_to_ptr.vmem [resolvable:$true] %s31
      %37 = dma.hbm_to_vmem [thread:$0]  %s1, 128, %s32, [#allocation6], 64, 64, 4
    $region9: #{tpu_custom_call.1} parent=1 // pred_fallthru
      _
    // Predicated region
    $region10: #{tpu_custom_call.1} parent=1 // pred_check
      _
    $region11: #{tpu_custom_call.1} parent=1 // pred_check_branch
      %39 = sbr.rel (0) target = $region13
    $region12: #{tpu_custom_call.1} parent=1 // pred_region
      %s41 = ssub.s32 1024, 1024
      %42 = vsyncadd [#allocation6], %s41
      %s43 = sshll.u32 [#allocation7], 4
      %s44 = int_to_ptr.vmem [resolvable:$true] %s43
      %49 = dma.hbm_to_vmem [thread:$0]  %s2, 1024, %s44, [#allocation6], 64, 64, 4
    $region13: #{tpu_custom_call.1} parent=1 // pred_fallthru
      _
    // Predicated region
    $region14: #{tpu_custom_call.1} parent=1 // pred_check
      _
    $region15: #{tpu_custom_call.1} parent=1 // pred_check_branch
      %51 = sbr.rel (0) target = $region17
    $region16: #{tpu_custom_call.1} parent=1 // pred_region
      _
    $region17: #{tpu_custom_call.1} parent=1 // pred_fallthru
      _
    // Predicated region
    $region18: #{tpu_custom_call.1} parent=1 // pred_check
      _
    $region19: #{tpu_custom_call.1} parent=1 // pred_check_branch
      %53 = sbr.rel (0) target = $region21
    $region20: #{tpu_custom_call.1} parent=1 // pred_region
      %s55 = ssub.s32 3072, 3072
      %56 = vsyncadd [#allocation9], %s55
      %s57 = sshll.u32 [#allocation8], 4
      %s58 = int_to_ptr.vmem [resolvable:$true] %s57
      %63 = dma.hbm_to_vmem [thread:$0]  %s4, 3072, %s58, [#allocation9], 192, 192, 12
    $region21: #{tpu_custom_call.1} parent=1 // pred_fallthru
      _
    // Predicated region
    $region22: #{tpu_custom_call.1} parent=1 // pred_check
      _
    $region23: #{tpu_custom_call.1} parent=1 // pred_check_branch
      %65 = sbr.rel (0) target = $region25
    $region24: #{tpu_custom_call.1} parent=1 // pred_region
      %66 = dma.done [#allocation3], 640
    $region25: #{tpu_custom_call.1} parent=1 // pred_fallthru
      _
    // Predicated region
    $region26: #{tpu_custom_call.1} parent=1 // pred_check
      _
    $region27: #{tpu_custom_call.1} parent=1 // pred_check_branch
      %68 = sbr.rel (0) target = $region29
    $region28: #{tpu_custom_call.1} parent=1 // pred_region
      %69 = dma.done [#allocation6], 128
    $region29: #{tpu_custom_call.1} parent=1 // pred_fallthru
      _
    // Predicated region
    $region30: #{tpu_custom_call.1} parent=1 // pred_check
      _
    $region31: #{tpu_custom_call.1} parent=1 // pred_check_branch
      %71 = sbr.rel (0) target = $region33
    $region32: #{tpu_custom_call.1} parent=1 // pred_region
      %72 = dma.done [#allocation6], 1024
    $region33: #{tpu_custom_call.1} parent=1 // pred_fallthru
      _
    // Predicated region
    $region34: #{tpu_custom_call.1} parent=1 // pred_check
      _
    $region35: #{tpu_custom_call.1} parent=1 // pred_check_branch
      %74 = sbr.rel (0) target = $region37
    $region36: #{tpu_custom_call.1} parent=1 // pred_region
      %75 = dma.done [#allocation9], 3072
    $region37: #{tpu_custom_call.1} parent=1 // pred_fallthru
      _
    %v77 = vld [vmem:[#allocation2] sm:$0xff]
    %v78 = vld [vmem:[#allocation2 + $0x8] sm:$0xff]
    %v79 = vld [vmem:[#allocation2 + $0x10] sm:$0xff]
    %v80 = vld [vmem:[#allocation2 + $0x18] sm:$0xff]
    %v81 = vld [vmem:[#allocation2 + $0x20] sm:$0xff]
    %v82 = vpack.c.bf16 %v78, %v77
    %v83 = vpack.c.bf16 %v80, %v79
    %v84 = vpack.c.bf16 %v81, %v81
    %v85 = vpack.c.bf16 %v77, %v77
    %v86 = vld [vmem:[#allocation5] sm:$0xf]
    %v87 = vld [vmem:[#allocation5 + $0x4] sm:$0xf]
    %v90 = vunpack.c.l.b16 %v86
    %v91 = vunpack.c.l.b16 %v87
    %v92 = vpack.c.b16 %v91, %v90
    %vm93 = vcmask 326656
    %v95 = vsel %vm93, %v92, 0
    %vm97 = vcmask 1043456
    %v99 = vsel %vm97, %v84, 0
    %101 = vmatprep.subr.bf16.mxu0 0
    %102 = vmatpush1.bf16.msra.mxu0 %v82
    %103 = vmatprep.subr.bf16.mxu0 0
    %104 = vmatpush1.bf16.msra.mxu0 %v83
    %105 = vmatprep.subr.bf16.mxu0 0
    %106 = vmatpush1.bf16.msra.mxu0 %v99
    %107 = vmatprep.subr.bf16.mxu0 0
    %108 = vmatpush1.bf16.msra.mxu0 0
    %109 = vmatprep.subr.bf16.mxu0 0
    %110 = vmatpush1.bf16.msra.mxu0 0
    %111 = vmatprep.subr.bf16.mxu0 0
    %112 = vmatpush1.bf16.msra.mxu0 0
    %113 = vmatprep.subr.bf16.mxu0 0
    %114 = vmatpush1.bf16.msra.mxu0 0
    %115 = vmatprep.subr.bf16.mxu0 0
    %116 = vmatpush1.bf16.msra.mxu0 0
    %117 = vmatprep.subr.bf16.mxu0 0
    %118 = vmatpush1.bf16.msra.mxu0 0
    %119 = vmatprep.subr.bf16.mxu0 0
    %120 = vmatpush1.bf16.msra.mxu0 0
    %121 = vmatprep.subr.bf16.mxu0 0
    %122 = vmatpush1.bf16.msra.mxu0 0
    %123 = vmatprep.subr.bf16.mxu0 0
    %124 = vmatpush1.bf16.msra.mxu0 0
    %125 = vmatprep.subr.bf16.mxu0 0
    %126 = vmatpush1.bf16.msra.mxu0 0
    %127 = vmatprep.subr.bf16.mxu0 0
    %128 = vmatpush1.bf16.msra.mxu0 0
    %129 = vmatprep.subr.bf16.mxu0 0
    %130 = vmatpush1.bf16.msra.mxu0 0
    %131 = vmatprep.subr.bf16.mxu0 0
    %132 = vmatpush1.bf16.msra.mxu0 0
    %133 = vmatprep.mubr.bf16.mxu0 0
    %134 = vmatmul.mubr.bf16.gmra.mrb[0].mxu0 %v95
    %v135 = vpop.f32.mrb[0].mxu0
    %v136 = vadd.f32 0.0, %v135
    %v137 = vpop.f32.mrb[0].mxu0
    %v138 = vpop.f32.mrb[0].mxu0
    %v139 = vadd.f32 0.0, %v138
    %v140 = vpop.f32.mrb[0].mxu0
    %141 = vdwg.mxu0
    %v142 = vld [vmem:[#allocation7] sm:$0xf]
    %v143 = vld [vmem:[#allocation7 + $0x4] sm:$0xf]
    %v144 = vld [vmem:[#allocation7 + $0x8] sm:$0xf]
    %v145 = vld [vmem:[#allocation7 + $0xc] sm:$0xf]
    %v146 = vld [vmem:[#allocation7 + $0x10] sm:$0xf]
    %v147 = vld [vmem:[#allocation7 + $0x14] sm:$0xf]
    %v148 = vld [vmem:[#allocation7 + $0x18] sm:$0xf]
    %v149 = vld [vmem:[#allocation7 + $0x1c] sm:$0xf]
    %v150 = vld [vmem:[#allocation7 + $0x20] sm:$0xf]
    %v151 = vld [vmem:[#allocation7 + $0x24] sm:$0xf]
    %v152 = vld [vmem:[#allocation7 + $0x28] sm:$0xf]
    %v153 = vld [vmem:[#allocation7 + $0x2c] sm:$0xf]
    %v154 = vld [vmem:[#allocation7 + $0x30] sm:$0xf]
    %v155 = vld [vmem:[#allocation7 + $0x34] sm:$0xf]
    %v156 = vld [vmem:[#allocation7 + $0x38] sm:$0xf]
    %v157 = vld [vmem:[#allocation7 + $0x3c] sm:$0xf]
    %v158 = vld [vmem:[%s3] sm:$0xff]
    %v175 = vunpack.c.l.b16 %v142
    %v176 = vunpack.c.l.b16 %v143
    %v177 = vunpack.c.l.b16 %v144
    %v178 = vunpack.c.l.b16 %v145
    %v179 = vunpack.c.l.b16 %v146
    %v180 = vunpack.c.l.b16 %v147
    %v181 = vunpack.c.l.b16 %v148
    %v182 = vunpack.c.l.b16 %v149
    %v183 = vunpack.c.l.b16 %v150
    %v184 = vunpack.c.l.b16 %v151
    %v185 = vunpack.c.l.b16 %v152
    %v186 = vunpack.c.l.b16 %v153
    %v187 = vunpack.c.l.b16 %v154
    %v188 = vunpack.c.l.b16 %v155
    %v189 = vunpack.c.l.b16 %v156
    %v190 = vunpack.c.l.b16 %v157
    %v191 = vpack.c.b16 %v176, %v175
    %v192 = vpack.c.b16 %v178, %v177
    %v193 = vpack.c.b16 %v180, %v179
    %v194 = vpack.c.b16 %v182, %v181
    %v195 = vpack.c.b16 %v184, %v183
    %v196 = vpack.c.b16 %v186, %v185
    %v197 = vpack.c.b16 %v188, %v187
    %v198 = vpack.c.b16 %v190, %v189
    %207 = vmatprep.subr.bf16.mxu0 0
    %208 = vmatpush1.bf16.msra.mxu0 %v191
    %209 = vmatprep.subr.bf16.mxu0 0
    %210 = vmatpush1.bf16.msra.mxu0 %v192
    %211 = vmatprep.subr.bf16.mxu0 0
    %212 = vmatpush1.bf16.msra.mxu0 %v193
    %213 = vmatprep.subr.bf16.mxu0 0
    %214 = vmatpush1.bf16.msra.mxu0 %v194
    %215 = vmatprep.subr.bf16.mxu0 0
    %216 = vmatpush1.bf16.msra.mxu0 %v195
    %217 = vmatprep.subr.bf16.mxu0 0
    %218 = vmatpush1.bf16.msra.mxu0 %v196
    %219 = vmatprep.subr.bf16.mxu0 0
    %220 = vmatpush1.bf16.msra.mxu0 %v197
    %221 = vmatprep.subr.bf16.mxu0 0
    %222 = vmatpush1.bf16.msra.mxu0 %v198
    %223 = vmatprep.subr.bf16.mxu0 0
    %224 = vmatpush1.bf16.msra.mxu0 0
    %225 = vmatprep.subr.bf16.mxu0 0
    %226 = vmatpush1.bf16.msra.mxu0 0
    %227 = vmatprep.subr.bf16.mxu0 0
    %228 = vmatpush1.bf16.msra.mxu0 0
    %229 = vmatprep.subr.bf16.mxu0 0
    %230 = vmatpush1.bf16.msra.mxu0 0
    %231 = vmatprep.subr.bf16.mxu0 0
    %232 = vmatpush1.bf16.msra.mxu0 0
    %233 = vmatprep.subr.bf16.mxu0 0
    %234 = vmatpush1.bf16.msra.mxu0 0
    %235 = vmatprep.subr.bf16.mxu0 0
    %236 = vmatpush1.bf16.msra.mxu0 0
    %237 = vmatprep.subr.bf16.mxu0 0
    %238 = vmatpush1.bf16.msra.mxu0 0
    %239 = vmatprep.mubr.bf16.mxu0 0
    %240 = vmatmul.mubr.bf16.gmra.mrb[0].mxu0 %v85
    %v241 = vpop.f32.mrb[0].mxu0
    %v242 = vadd.f32 %v158, %v241
    %v243 = vpop.f32.mrb[0].mxu0
    %v244 = vpop.f32.mrb[0].mxu0
    %v245 = vpop.f32.mrb[0].mxu0
    %246 = vdwg.mxu0
    %v247 = vxor.u32 %v242, 2147483648
    %v248 = vmul.f32 %v247, 1.442695
    %v249 = vpow.pop %v248
    %v250 = vadd.f32 %v249, 1.0
    %v251 = vrcp.pop %v250
    %v252 = vmul.f32 1.0, %v251
    %v253 = vpack.c.bf16 %v252, %v252
    %v254 = vld [vmem:[#allocation8] sm:$0xff]
    %v255 = vld [vmem:[#allocation8 + $0x8] sm:$0xf]
    %v256 = vld [vmem:[#allocation8 + $0xc] sm:$0xff]
    %v257 = vld [vmem:[#allocation8 + $0x14] sm:$0xf]
    %v258 = vld [vmem:[#allocation8 + $0x18] sm:$0xff]
    %v259 = vld [vmem:[#allocation8 + $0x20] sm:$0xf]
    %v260 = vld [vmem:[#allocation8 + $0x24] sm:$0xff]
    %v261 = vld [vmem:[#allocation8 + $0x2c] sm:$0xf]
    %v262 = vld [vmem:[#allocation8 + $0x30] sm:$0xff]
    %v263 = vld [vmem:[#allocation8 + $0x38] sm:$0xf]
    %v264 = vld [vmem:[#allocation8 + $0x3c] sm:$0xff]
    %v265 = vld [vmem:[#allocation8 + $0x44] sm:$0xf]
    %v266 = vld [vmem:[#allocation8 + $0x48] sm:$0xff]
    %v267 = vld [vmem:[#allocation8 + $0x50] sm:$0xf]
    %v268 = vld [vmem:[#allocation8 + $0x54] sm:$0xff]
    %v269 = vld [vmem:[#allocation8 + $0x5c] sm:$0xf]
    %v270 = vld [vmem:[#allocation8 + $0x60] sm:$0xff]
    %v271 = vld [vmem:[#allocation8 + $0x68] sm:$0xf]
    %v272 = vld [vmem:[#allocation8 + $0x6c] sm:$0xff]
    %v273 = vld [vmem:[#allocation8 + $0x74] sm:$0xf]
    %v274 = vld [vmem:[#allocation8 + $0x78] sm:$0xff]
    %v275 = vld [vmem:[#allocation8 + $0x80] sm:$0xf]
    %v276 = vld [vmem:[#allocation8 + $0x84] sm:$0xff]
    %v277 = vld [vmem:[#allocation8 + $0x8c] sm:$0xf]
    %v278 = vld [vmem:[#allocation8 + $0x90] sm:$0xff]
    %v279 = vld [vmem:[#allocation8 + $0x98] sm:$0xf]
    %v280 = vld [vmem:[#allocation8 + $0x9c] sm:$0xff]
    %v281 = vld [vmem:[#allocation8 + $0xa4] sm:$0xf]
    %v282 = vld [vmem:[#allocation8 + $0xa8] sm:$0xff]
    %v283 = vld [vmem:[#allocation8 + $0xb0] sm:$0xf]
    %v284 = vld [vmem:[#allocation8 + $0xb4] sm:$0xff]
    %v285 = vld [vmem:[#allocation8 + $0xbc] sm:$0xf]
    %v318 = vunpack.c.l.b16 %v254
    %v319 = vunpack.c.h.b16 %v254
    %v320 = vunpack.c.l.b16 %v255
    %v321 = vunpack.c.l.b16 %v256
    %v322 = vunpack.c.h.b16 %v256
    %v323 = vunpack.c.l.b16 %v257
    %v324 = vunpack.c.l.b16 %v258
    %v325 = vunpack.c.h.b16 %v258
    %v326 = vunpack.c.l.b16 %v259
    %v327 = vunpack.c.l.b16 %v260
    %v328 = vunpack.c.h.b16 %v260
    %v329 = vunpack.c.l.b16 %v261
    %v330 = vunpack.c.l.b16 %v262
    %v331 = vunpack.c.h.b16 %v262
    %v332 = vunpack.c.l.b16 %v263
    %v333 = vunpack.c.l.b16 %v264
    %v334 = vunpack.c.h.b16 %v264
    %v335 = vunpack.c.l.b16 %v265
    %v336 = vunpack.c.l.b16 %v266
    %v337 = vunpack.c.h.b16 %v266
    %v338 = vunpack.c.l.b16 %v267
    %v339 = vunpack.c.l.b16 %v268
    %v340 = vunpack.c.h.b16 %v268
    %v341 = vunpack.c.l.b16 %v269
    %v342 = vunpack.c.l.b16 %v270
    %v343 = vunpack.c.h.b16 %v270
    %v344 = vunpack.c.l.b16 %v271
    %v345 = vunpack.c.l.b16 %v272
    %v346 = vunpack.c.h.b16 %v272
    %v347 = vunpack.c.l.b16 %v273
    %v348 = vunpack.c.l.b16 %v274
    %v349 = vunpack.c.h.b16 %v274
    %v350 = vunpack.c.l.b16 %v275
    %v351 = vunpack.c.l.b16 %v276
    %v352 = vunpack.c.h.b16 %v276
    %v353 = vunpack.c.l.b16 %v277
    %v354 = vunpack.c.l.b16 %v278
    %v355 = vunpack.c.h.b16 %v278
    %v356 = vunpack.c.l.b16 %v279
    %v357 = vunpack.c.l.b16 %v280
    %v358 = vunpack.c.h.b16 %v280
    %v359 = vunpack.c.l.b16 %v281
    %v360 = vunpack.c.l.b16 %v282
    %v361 = vunpack.c.h.b16 %v282
    %v362 = vunpack.c.l.b16 %v283
    %v363 = vunpack.c.l.b16 %v284
    %v364 = vunpack.c.h.b16 %v284
    %v365 = vunpack.c.l.b16 %v285
    %v366 = vpack.c.b16 %v321, %v318
    %v367 = vpack.c.b16 %v322, %v319
    %v368 = vpack.c.b16 %v323, %v320
    %v369 = vpack.c.b16 %v327, %v324
    %v370 = vpack.c.b16 %v328, %v325
    %v371 = vpack.c.b16 %v329, %v326
    %v372 = vpack.c.b16 %v333, %v330
    %v373 = vpack.c.b16 %v334, %v331
    %v374 = vpack.c.b16 %v335, %v332
    %v375 = vpack.c.b16 %v339, %v336
    %v376 = vpack.c.b16 %v340, %v337
    %v377 = vpack.c.b16 %v341, %v338
    %v378 = vpack.c.b16 %v345, %v342
    %v379 = vpack.c.b16 %v346, %v343
    %v380 = vpack.c.b16 %v347, %v344
    %v381 = vpack.c.b16 %v351, %v348
    %v382 = vpack.c.b16 %v352, %v349
    %v383 = vpack.c.b16 %v353, %v350
    %v384 = vpack.c.b16 %v357, %v354
    %v385 = vpack.c.b16 %v358, %v355
    %v386 = vpack.c.b16 %v359, %v356
    %v387 = vpack.c.b16 %v363, %v360
    %v388 = vpack.c.b16 %v364, %v361
    %v389 = vpack.c.b16 %v365, %v362
    %414 = vmatprep.subr.bf16.mxu0 %v367
    %415 = vmatpush1.bf16.msra.mxu0 %v366
    %416 = vmatprep.subr.bf16.mxu0 %v370
    %417 = vmatpush1.bf16.msra.mxu0 %v369
    %418 = vmatprep.subr.bf16.mxu0 %v373
    %419 = vmatpush1.bf16.msra.mxu0 %v372
    %420 = vmatprep.subr.bf16.mxu0 %v376
    %421 = vmatpush1.bf16.msra.mxu0 %v375
    %422 = vmatprep.subr.bf16.mxu0 %v379
    %423 = vmatpush1.bf16.msra.mxu0 %v378
    %424 = vmatprep.subr.bf16.mxu0 %v382
    %425 = vmatpush1.bf16.msra.mxu0 %v381
    %426 = vmatprep.subr.bf16.mxu0 %v385
    %427 = vmatpush1.bf16.msra.mxu0 %v384
    %428 = vmatprep.subr.bf16.mxu0 %v388
    %429 = vmatpush1.bf16.msra.mxu0 %v387
    %430 = vmatprep.subr.bf16.mxu0 0
    %431 = vmatpush1.bf16.msra.mxu0 0
    %432 = vmatprep.subr.bf16.mxu0 0
    %433 = vmatpush1.bf16.msra.mxu0 0
    %434 = vmatprep.subr.bf16.mxu0 0
    %435 = vmatpush1.bf16.msra.mxu0 0
    %436 = vmatprep.subr.bf16.mxu0 0
    %437 = vmatpush1.bf16.msra.mxu0 0
    %438 = vmatprep.subr.bf16.mxu0 0
    %439 = vmatpush1.bf16.msra.mxu0 0
    %440 = vmatprep.subr.bf16.mxu0 0
    %441 = vmatpush1.bf16.msra.mxu0 0
    %442 = vmatprep.subr.bf16.mxu0 0
    %443 = vmatpush1.bf16.msra.mxu0 0
    %444 = vmatprep.subr.bf16.mxu0 0
    %445 = vmatpush1.bf16.msra.mxu0 0
    %446 = vmatprep.mubr.bf16.mxu0 0
    %447 = vmatmul.mubr.bf16.gmra.mrb[0].mxu0 %v253
    %v448 = vpop.f32.mrb[0].mxu0
    %v449 = vadd.f32 0.0, %v448
    %v450 = vpop.f32.mrb[0].mxu0
    %v451 = vadd.f32 0.0, %v450
    %v452 = vpop.f32.mrb[0].mxu0
    %v453 = vpop.f32.mrb[0].mxu0
    %454 = vdwg.mxu0
    %455 = vmatprep.subr.bf16.mxu0 0
    %456 = vmatpush1.bf16.msra.mxu0 %v368
    %457 = vmatprep.subr.bf16.mxu0 0
    %458 = vmatpush1.bf16.msra.mxu0 %v371
    %459 = vmatprep.subr.bf16.mxu0 0
    %460 = vmatpush1.bf16.msra.mxu0 %v374
    %461 = vmatprep.subr.bf16.mxu0 0
    %462 = vmatpush1.bf16.msra.mxu0 %v377
    %463 = vmatprep.subr.bf16.mxu0 0
    %464 = vmatpush1.bf16.msra.mxu0 %v380
    %465 = vmatprep.subr.bf16.mxu0 0
    %466 = vmatpush1.bf16.msra.mxu0 %v383
    %467 = vmatprep.subr.bf16.mxu0 0
    %468 = vmatpush1.bf16.msra.mxu0 %v386
    %469 = vmatprep.subr.bf16.mxu0 0
    %470 = vmatpush1.bf16.msra.mxu0 %v389
    %471 = vmatprep.subr.bf16.mxu0 0
    %472 = vmatpush1.bf16.msra.mxu0 0
    %473 = vmatprep.subr.bf16.mxu0 0
    %474 = vmatpush1.bf16.msra.mxu0 0
    %475 = vmatprep.subr.bf16.mxu0 0
    %476 = vmatpush1.bf16.msra.mxu0 0
    %477 = vmatprep.subr.bf16.mxu0 0
    %478 = vmatpush1.bf16.msra.mxu0 0
    %479 = vmatprep.subr.bf16.mxu0 0
    %480 = vmatpush1.bf16.msra.mxu0 0
    %481 = vmatprep.subr.bf16.mxu0 0
    %482 = vmatpush1.bf16.msra.mxu0 0
    %483 = vmatprep.subr.bf16.mxu0 0
    %484 = vmatpush1.bf16.msra.mxu0 0
    %485 = vmatprep.subr.bf16.mxu0 0
    %486 = vmatpush1.bf16.msra.mxu0 0
    %487 = vmatprep.mubr.bf16.mxu0 0
    %488 = vmatmul.mubr.bf16.gmra.mrb[0].mxu0 %v253
    %v489 = vpop.f32.mrb[0].mxu0
    %v490 = vadd.f32 0.0, %v489
    %v491 = vpop.f32.mrb[0].mxu0
    %v492 = vpop.f32.mrb[0].mxu0
    %v493 = vpop.f32.mrb[0].mxu0
    %494 = vdwg.mxu0
    %v495 = vmul.f32 %v136, %v449
    %v496 = vmul.f32 %v139, %v451
    %v497 = vadd.f32 %v495, %v496
    %v498 = vmul.f32 %v77, %v490
    %v499 = vadd.f32 %v497, %v498
    %v500 = vmax.f32 %v499, 0.0
    %501 = vst [vmem:[#allocation10] sm:$0xff] %v500
    // Predicated region
    $region38: #{tpu_custom_call.1} parent=1 // pred_check
      _
    $region39: #{tpu_custom_call.1} parent=1 // pred_check_branch
      %503 = sbr.rel (0) target = $region41
    $region40: #{tpu_custom_call.1} parent=1 // pred_region
      %s505 = ssub.s32 128, 128
      %506 = vsyncadd [#allocation4], %s505
      %s508 = sshll.u32 [#allocation10], 4
      %s509 = int_to_ptr.vmem [resolvable:$true] %s508
      %511 = dma.vmem_to_hbm [thread:$0]  %s509, 128, %s5, [#allocation4]
    $region41: #{tpu_custom_call.1} parent=1 // pred_fallthru
      _
    // Predicated region
    $region42: #{tpu_custom_call.1} parent=1 // pred_check
      _
    $region43: #{tpu_custom_call.1} parent=1 // pred_check_branch
      %513 = sbr.rel (0) target = $region45
    $region44: #{tpu_custom_call.1} parent=1 // pred_region
      %514 = dma.done [#allocation4], 128
    $region45: #{tpu_custom_call.1} parent=1 // pred_fallthru
      _
    %515 = vsyncpa [#allocation3], 1
    %516 = vsyncpa [#allocation6], 1
    %517 = vsyncpa [#allocation9], 1
    %518 = vsyncpa [#allocation4], 1

</llo_original>
